<compile_context>
chip_gen: v7x
topology: tpu7x:2x2x1
jax: 0.10.0
libtpu: 0.0.40
codegen_flags: <defaults>
</compile_context>

<pallas_src>
import math

import jax
import jax.numpy as jnp
from jax.experimental import pallas as pl
from jax.experimental.pallas import tpu as pltpu


def _round_up(n: int, m: int) -> int:
    return ((n + m - 1) // m) * m


def _preembed_kernel(x_ref, o_ref):
    # Elementwise f32 -> i32 cast on one (block_rows, cols) tile.  float->int
    # casts truncate toward zero, matching torch's .to(torch.long) for finite
    # in-range values (NaN/inf behavior is unspecified, as in torch on TPU).
    o_ref[...] = x_ref[...].astype(jnp.int32)


def _choose_block_rows(rows: int, cols: int, target_block_bytes: int) -> int:
    """Rows per grid step: either a multiple of 8 or the full row extent."""
    if rows <= 8:
        return rows
    # ~target_block_bytes of f32 input per block.
    br = (target_block_bytes // (4 * max(cols, 1))) // 8 * 8
    br = max(br, 8)
    if br < rows:
        return br
    # A single block would cover everything.  For streams big enough to be
    # worth splitting, force >= 2 grid steps so the "parallel" axis gives
    # v7x's second TensorCore half of the bandwidth-bound work.
    if rows >= 16 and rows * cols * 4 >= (2 << 20):
        return min(_round_up(pl.cdiv(rows, 2), 8), rows)
    return rows


def pre_embed(x, *, target_block_bytes: int = 4 << 20):
    """Pallas implementation of PreEmbed.forward.

    x: (..., 1) float array  ->  (...) int32 array.
    """
    assert x.shape[-1] == 1, "PreEmbed expects a trailing singleton dim"
    out_shape = x.shape[:-1]

    # Natural 2D view: (prod(leading dims), last output dim).  For row-major
    # inputs this reshape (and the inverse on the result) is bitcast-level
    # layout plumbing — no pad, no slice, no extra HBM traffic.
    cols = out_shape[-1] if len(out_shape) >= 1 else 1
    rows = math.prod(out_shape[:-1]) if len(out_shape) >= 1 else 1
    x2d = jnp.reshape(x, (rows, cols))

    block_rows = _choose_block_rows(rows, cols, target_block_bytes)
    grid = (pl.cdiv(rows, block_rows),)   # partial last block is masked

    y2d = pl.pallas_call(
        _preembed_kernel,
        out_shape=jax.ShapeDtypeStruct((rows, cols), jnp.int32),
        grid=grid,
        in_specs=[pl.BlockSpec((block_rows, cols), lambda i: (i, 0))],
        out_specs=pl.BlockSpec((block_rows, cols), lambda i: (i, 0)),
        compiler_params=pltpu.CompilerParams(
            dimension_semantics=("parallel",),
            vmem_limit_bytes=32 << 20,
        ),
        cost_estimate=pl.CostEstimate(
            flops=0,
            transcendentals=0,
            bytes_accessed=8 * rows * cols,  # 4 B read + 4 B written per elem
        ),
    )(x2d)

    return jnp.reshape(y2d, out_shape)


if __name__ == "__main__":
    key = jax.random.PRNGKey(0)
    k0, k1, k2 = jax.random.split(key, 3)

    # Case 1: tiny (batch, seq, 1) index-like values — single full-extent block.
    B, N = 2, 8
    x1 = jax.random.uniform(k0, (B, N, 1), dtype=jnp.float32,
                            minval=0.0, maxval=10.0)
    y1 = jax.block_until_ready(pre_embed(x1))
    ref1 = jnp.squeeze(x1, axis=-1).astype(jnp.int32)
    assert y1.shape == (B, N), y1.shape
    assert y1.dtype == jnp.int32, y1.dtype
    assert bool(jnp.all(y1 == ref1)), "mismatch vs reference (small)"

    # Case 2: ragged last dim — exercises the full-extent lane exemption
    # (no padding, no tail slice anywhere).
    B2, N2 = 4, 600
    x2 = jax.random.uniform(k1, (B2, N2, 1), dtype=jnp.float32,
                            minval=0.0, maxval=10.0)
    y2 = jax.block_until_ready(pre_embed(x2))
    ref2 = jnp.squeeze(x2, axis=-1).astype(jnp.int32)
    assert y2.shape == (B2, N2), y2.shape
    assert bool(jnp.all(y2 == ref2)), "mismatch vs reference (ragged lanes)"

    # Case 3: multi-step grid with a masked partial last block (tiny
    # target_block_bytes only to exercise the tiled path at test scale).
    R3, C3 = 37, 256
    x3 = jax.random.uniform(k2, (R3, C3, 1), dtype=jnp.float32,
                            minval=0.0, maxval=10.0)
    y3 = jax.block_until_ready(pre_embed(x3, target_block_bytes=16 << 10))
    ref3 = jnp.squeeze(x3, axis=-1).astype(jnp.int32)
    assert y3.shape == (R3, C3), y3.shape
    assert bool(jnp.all(y3 == ref3)), "mismatch vs reference (partial block)"

    print("KERNEL_OK")
</pallas_src>

<mosaic_0001>
module attributes {stable_mosaic.version = 11 : i64} {
  func.func @_preembed_kernel(%arg0: i32, %arg1: memref<2x8xf32, #tpu.memory_space<vmem>>, %arg2: memref<2x8xi32, #tpu.memory_space<vmem>>) attributes {dimension_semantics = [#tpu.dimension_semantics<parallel>], iteration_bounds = array<i64: 1>, scalar_prefetch = 0 : i64, scratch_operands = 0 : i64, tpu.core_type = #tpu.core_type<tc>, window_params = [{transform_indices = @transform_0, window_bounds = array<i64: 2, 8>}, {transform_indices = @transform_1, window_bounds = array<i64: 2, 8>}]} {
    %c0 = arith.constant 0 : index
    %c0_0 = arith.constant 0 : index
    %0 = vector.load %arg1[%c0, %c0_0] : memref<2x8xf32, #tpu.memory_space<vmem>>, vector<2x8xf32>
    %1 = arith.fptosi %0 : vector<2x8xf32> to vector<2x8xi32>
    %c0_1 = arith.constant 0 : index
    %c0_2 = arith.constant 0 : index
    %2 = vector.load %arg2[%c0_1, %c0_2] : memref<2x8xi32, #tpu.memory_space<vmem>>, vector<2x8xi32>
    tpu.vector_store %arg2[%c0_1, %c0_2], %1 {strides = array<i32>} : memref<2x8xi32, #tpu.memory_space<vmem>>, vector<2x8xi32>,
    return
  }
  func.func @transform_0(%arg0: i32) -> (i32, i32) {
    %c0_i32 = arith.constant 0 : i32
    %c0_i32_0 = arith.constant 0 : i32
    return %arg0, %c0_i32 : i32, i32
  }
  func.func @transform_1(%arg0: i32) -> (i32, i32) {
    %c0_i32 = arith.constant 0 : i32
    %c0_i32_0 = arith.constant 0 : i32
    return %arg0, %c0_i32 : i32, i32
  }
}

</mosaic_0001>

<llo_original>
// kernel: tpu_custom_call.1
$region0: #{tpu_custom_call.1}
  #allocation0 [shape = 'u32[]', space=smem, size = 0x4, offset = 0x4, fixed_abs, tag = 'smem constant byte address 0x4 - core index']
  #allocation1 [shape = 'u32[144,128]{1,0:T(1,128)}', space=vmem, size = 0x12000, scoped, tag = 'internal scratch']
  %s0 = inlined_call_operand.hbm [shape: f32[2,8], index: 0, kind: input, shape index: {}]
  %s1 = inlined_call_operand.hbm [shape: s32[2,8], index: 1, kind: output, shape index: {}]
  %s2 = sld [smem:[#allocation0]]
  $region18: #{tpu_custom_call.1} parent=0
    _
  %s4 = ssub.s32 1, %s2
  %s5 = scalar_select 0, %s4, %s2
  $region1: #{tpu_custom_call.1} parent=0
    #allocation2 [shape = 'u8[1024]{0}', space=vmem, size = 0x400, scoped, tag = 'input window, operand 0, single buffered']
    #allocation3 [shape = 's32[1]{0}', space=sflag, size = 0x4, scoped, tag = 'scoped memory for tpu_custom_call.1']
    #allocation4 [shape = 's32[1]{0}', space=sflag, size = 0x4, scoped, tag = 'scoped memory for tpu_custom_call.1']
    #allocation5 [shape = 'u8[1024]{0}', space=vmem, size = 0x400, scoped, tag = 'output window, operand 0, single buffered']
    %6 = vsyncpa [#allocation3], 0
    %7 = vsyncpa [#allocation4], 0
    // Predicated region
    $region2: #{tpu_custom_call.1} parent=1 // pred_check
      _
    $region3: #{tpu_custom_call.1} parent=1 // pred_check_branch
      %9 = sbr.rel (0) target = $region5
    $region4: #{tpu_custom_call.1} parent=1 // pred_region
      %s11 = ssub.s32 32, 32
      %12 = vsyncadd [#allocation3], %s11
      %s14 = sshll.u32 [#allocation2], 4
      %s15 = int_to_ptr.vmem [resolvable:$true] %s14
      %17 = dma.hbm_to_vmem [thread:$0]  %s0, 32, %s15, [#allocation3]
    $region5: #{tpu_custom_call.1} parent=1 // pred_fallthru
      _
    // Predicated region
    $region6: #{tpu_custom_call.1} parent=1 // pred_check
      _
    $region7: #{tpu_custom_call.1} parent=1 // pred_check_branch
      %19 = sbr.rel (0) target = $region9
    $region8: #{tpu_custom_call.1} parent=1 // pred_region
      %20 = dma.done [#allocation3], 32
    $region9: #{tpu_custom_call.1} parent=1 // pred_fallthru
      _
    %v21 = vld [vmem:[#allocation2] sm:$0x3]
    %v22 = vcvt.f32.s32.to.zero.pseudo %v21
    %vm23 = vcmask 58368
    %24 = vst.msk [vmem:[#allocation5] sm:$0x3] %vm23, %v22
    // Predicated region
    $region10: #{tpu_custom_call.1} parent=1 // pred_check
      _
    $region11: #{tpu_custom_call.1} parent=1 // pred_check_branch
      %26 = sbr.rel (0) target = $region13
    $region12: #{tpu_custom_call.1} parent=1 // pred_region
      %s28 = ssub.s32 32, 32
      %29 = vsyncadd [#allocation4], %s28
      %s31 = sshll.u32 [#allocation5], 4
      %s32 = int_to_ptr.vmem [resolvable:$true] %s31
      %34 = dma.vmem_to_hbm [thread:$0]  %s32, 32, %s1, [#allocation4]
    $region13: #{tpu_custom_call.1} parent=1 // pred_fallthru
      _
    // Predicated region
    $region14: #{tpu_custom_call.1} parent=1 // pred_check
      _
    $region15: #{tpu_custom_call.1} parent=1 // pred_check_branch
      %36 = sbr.rel (0) target = $region17
    $region16: #{tpu_custom_call.1} parent=1 // pred_region
      %37 = dma.done [#allocation4], 32
    $region17: #{tpu_custom_call.1} parent=1 // pred_fallthru
      _
    %38 = vsyncpa [#allocation3], 1
    %39 = vsyncpa [#allocation4], 1

</llo_original>
